<compile_context>
chip_gen: v6e
topology: v6e:2x2x1
jax: 0.10.0
libtpu: 0.0.40
codegen_flags: <defaults>
</compile_context>

<pallas_src>
import jax
import jax.numpy as jnp
from jax.experimental import pallas as pl
from jax.experimental.pallas import tpu as pltpu

_LANE = 128


def _rescale_kernel(scale_ref, x_ref, o_ref):
    # scale_ref: SMEM (1,) holding exp(weight); x_ref/o_ref: (tr, C) VMEM tiles.
    o_ref[...] = scale_ref[0] * x_ref[...]


def _sublane_multiple(dtype):
    # Native tile sublane count: 8 for 4-byte, 16 for 2-byte, 32 for 1-byte.
    itemsize = jnp.dtype(dtype).itemsize
    return max(8, 32 // max(itemsize, 1))


def _pick_cols(total, sub):
    """Widest lane count (multiple of 128, <=1024) that divides `total` and
    leaves at least one full sublane tile of rows; falls back gracefully."""
    for c in (1024, 512, 256, 128):
        if total % c == 0 and total // c >= sub:
            return c
    for c in (1024, 512, 256, 128):
        if total % c == 0:
            return c
    return _LANE


def rescale(x, weight, *, block_bytes=2 << 20):
    """Pallas implementation of Rescale.forward: out = exp(weight) * x.

    x:      jnp array of any shape (float dtype)
    weight: jnp array of shape (1,)
    """
    # TODO(synk): the PyTorch module raises RuntimeError when exp(weight) has
    # NaN entries; a host-side raise needs a blocking sync and is not
    # jit-compatible, so NaNs propagate instead (wrap with
    # jax.experimental.checkify at the call site if a hard error is required).
    scale = jnp.exp(weight).reshape((1,)).astype(x.dtype)   # one tiny XLA op

    orig_shape = x.shape
    total = x.size
    itemsize = jnp.dtype(x.dtype).itemsize
    sub = _sublane_multiple(x.dtype)

    # Lane-dense 2-D slab layout.
    cols = _pick_cols(total, sub)
    n_rows = -(-total // cols)                              # ceil(total / cols)

    # Rows per tile: ~block_bytes per input tile, rounded to the sublane
    # multiple, capped at the (padded) row count.
    target_rows = max(sub, block_bytes // (cols * itemsize))
    tr = min(target_rows, n_rows)
    tr = -(-tr // sub) * sub                                # multiple of sublanes
    padded_rows = -(-n_rows // tr) * tr                     # pad rows to tile grid
    pad = padded_rows * cols - total

    xf = x.reshape(-1)
    if pad:
        xf = jnp.pad(xf, (0, pad))
    x2d = xf.reshape(padded_rows, cols)

    grid = (padded_rows // tr,)

    out2d = pl.pallas_call(
        _rescale_kernel,
        out_shape=jax.ShapeDtypeStruct(x2d.shape, x2d.dtype),
        grid=grid,
        in_specs=[
            pl.BlockSpec(memory_space=pltpu.SMEM),          # scalar exp(weight)
            pl.BlockSpec((tr, cols), lambda i: (i, 0)),     # lane-dense tile
        ],
        out_specs=pl.BlockSpec((tr, cols), lambda i: (i, 0)),
        compiler_params=pltpu.CompilerParams(
            dimension_semantics=("parallel",),
        ),
    )(scale, x2d)

    out = out2d.reshape(-1)
    if pad:
        out = out[:total]
    return out.reshape(orig_shape)


if __name__ == "__main__":
    key = jax.random.PRNGKey(0)

    # Small NCHW input consistent with the module's usage in graphbp.py.
    x = jax.random.normal(key, (2, 4, 16, 16), dtype=jnp.float32)

    # Deterministic parameter init matching nn.Parameter(torch.zeros([1])).
    weight = jnp.zeros((1,), dtype=jnp.float32)

    out = jax.block_until_ready(rescale(x, weight))
    ref = jnp.exp(weight[0]) * x
    assert out.shape == x.shape
    assert jnp.allclose(out, ref, atol=1e-6), "mismatch vs reference"

    # Same check under jit (no host syncs anywhere in the path).
    out_jit = jax.block_until_ready(jax.jit(rescale)(x, weight))
    assert jnp.allclose(out_jit, ref, atol=1e-6), "jit mismatch vs reference"

    # Non-trivial weight + ragged shape to exercise the padded-tail path.
    w2 = jnp.full((1,), 0.37, dtype=jnp.float32)
    x2 = jax.random.normal(jax.random.PRNGKey(1), (3, 5, 7), dtype=jnp.float32)
    out2 = jax.block_until_ready(rescale(x2, w2))
    ref2 = jnp.exp(w2[0]) * x2
    assert out2.shape == x2.shape
    assert jnp.allclose(out2, ref2, atol=1e-6), "padded-path mismatch vs reference"

    print("KERNEL_OK")
</pallas_src>

<mosaic_0001>
module attributes {stable_mosaic.version = 11 : i64} {
  func.func @_rescale_kernel(%arg0: i32, %arg1: memref<1xf32, #tpu.memory_space<smem>>, %arg2: memref<8x256xf32, #tpu.memory_space<vmem>>, %arg3: memref<8x256xf32, #tpu.memory_space<vmem>>) attributes {dimension_semantics = [#tpu.dimension_semantics<parallel>], iteration_bounds = array<i64: 1>, scalar_prefetch = 0 : i64, scratch_operands = 0 : i64, tpu.core_type = #tpu.core_type<tc>, window_params = [{transform_indices = @transform_0, window_bounds = array<i64: 1>}, {transform_indices = @transform_1, window_bounds = array<i64: 8, 256>}, {transform_indices = @transform_2, window_bounds = array<i64: 8, 256>}]} {
    %c0 = arith.constant 0 : index
    %0 = memref.load %arg1[%c0] : memref<1xf32, #tpu.memory_space<smem>>
    %c0_0 = arith.constant 0 : index
    %c0_1 = arith.constant 0 : index
    %1 = vector.load %arg2[%c0_0, %c0_1] : memref<8x256xf32, #tpu.memory_space<vmem>>, vector<8x256xf32>
    %2 = vector.broadcast %0 : f32 to vector<8x256xf32>
    %3 = arith.mulf %2, %1 : vector<8x256xf32>
    %c0_2 = arith.constant 0 : index
    %c0_3 = arith.constant 0 : index
    %4 = vector.load %arg3[%c0_2, %c0_3] : memref<8x256xf32, #tpu.memory_space<vmem>>, vector<8x256xf32>
    tpu.vector_store %arg3[%c0_2, %c0_3], %3 {strides = array<i32>} : memref<8x256xf32, #tpu.memory_space<vmem>>, vector<8x256xf32>,
    return
  }
  func.func @transform_0(%arg0: i32) -> i32 {
    %c0_i32 = arith.constant 0 : i32
    %c0_i32_0 = arith.constant 0 : i32
    return %c0_i32 : i32
  }
  func.func @transform_1(%arg0: i32) -> (i32, i32) {
    %c0_i32 = arith.constant 0 : i32
    %c0_i32_0 = arith.constant 0 : i32
    return %arg0, %c0_i32 : i32, i32
  }
  func.func @transform_2(%arg0: i32) -> (i32, i32) {
    %c0_i32 = arith.constant 0 : i32
    %c0_i32_0 = arith.constant 0 : i32
    return %arg0, %c0_i32 : i32, i32
  }
}

</mosaic_0001>

<llo_original>
// kernel: tpu_custom_call.1
$region0: #{tpu_custom_call.1}
  #allocation0 [shape = 'u32[]', space=smem, size = 0x4, offset = 0x4, fixed_abs, tag = 'smem constant byte address 0x4 - core index']
  #allocation1 [shape = 'u32[144,128]{1,0:T(1,128)}', space=vmem, size = 0x12000, scoped, tag = 'internal scratch']
  #allocation2 [shape = 'f32[1]{0:T(128)S(6)}', space=smem, size = 0x200, scoped, tag = 'scoped memory for tpu_custom_call.1']
  %s0 = inlined_call_operand.<no memory space> [shape: f32[1], index: 0, kind: input, shape index: {}]
  %s1 = inlined_call_operand.hbm [shape: f32[8,256], index: 1, kind: input, shape index: {}]
  %s2 = inlined_call_operand.hbm [shape: f32[8,256], index: 2, kind: output, shape index: {}]
  %s3 = sld [smem:[#allocation0]]
  $region22: #{tpu_custom_call.1} parent=0
    _
  %s5 = ssub.s32 1, %s3
  %s6 = scalar_select 0, %s5, %s3
  %7 = sst [smem:[#allocation2]] %s0
  $region1: #{tpu_custom_call.1} parent=0
    #allocation3 [shape = 'u8[8192]{0}', space=vmem, size = 0x2000, scoped, tag = 'input window, operand 1, single buffered']
    #allocation4 [shape = 's32[1]{0}', space=sflag, size = 0x4, scoped, tag = 'scoped memory for tpu_custom_call.1']
    #allocation5 [shape = 's32[1]{0}', space=sflag, size = 0x4, scoped, tag = 'scoped memory for tpu_custom_call.1']
    #allocation6 [shape = 'u8[8192]{0}', space=vmem, size = 0x2000, scoped, tag = 'output window, operand 0, single buffered']
    %8 = vsyncpa [#allocation4], 0
    %9 = vsyncpa [#allocation5], 0
    // Predicated region
    $region2: #{tpu_custom_call.1} parent=1 // pred_check
      _
    $region3: #{tpu_custom_call.1} parent=1 // pred_check_branch
      %11 = sbr.rel (0) target = $region5
    $region4: #{tpu_custom_call.1} parent=1 // pred_region
      _
    $region5: #{tpu_custom_call.1} parent=1 // pred_fallthru
      _
    // Predicated region
    $region6: #{tpu_custom_call.1} parent=1 // pred_check
      _
    $region7: #{tpu_custom_call.1} parent=1 // pred_check_branch
      %13 = sbr.rel (0) target = $region9
    $region8: #{tpu_custom_call.1} parent=1 // pred_region
      %s15 = ssub.s32 256, 256
      %16 = vsyncadd [#allocation4], %s15
      %s18 = sshll.u32 [#allocation3], 4
      %s19 = int_to_ptr.vmem [resolvable:$true] %s18
      %21 = dma.hbm_to_vmem [thread:$0]  %s1, 256, %s19, [#allocation4]
    $region9: #{tpu_custom_call.1} parent=1 // pred_fallthru
      _
    // Predicated region
    $region10: #{tpu_custom_call.1} parent=1 // pred_check
      _
    $region11: #{tpu_custom_call.1} parent=1 // pred_check_branch
      %23 = sbr.rel (0) target = $region13
    $region12: #{tpu_custom_call.1} parent=1 // pred_region
      %24 = dma.done [#allocation4], 256
    $region13: #{tpu_custom_call.1} parent=1 // pred_fallthru
      _
    %s25 = sld [smem:[#allocation2]]
    %v26 = vld [vmem:[#allocation3] sm:$0xff]
    %v27 = vld [vmem:[#allocation3 + $0x8] sm:$0xff]
    %v28 = vstv %s25
    %v29 = vmul.f32 %v28, %v26
    %v30 = vmul.f32 %v28, %v27
    %31 = vst [vmem:[#allocation6] sm:$0xff] %v29
    %32 = vst [vmem:[#allocation6 + $0x8] sm:$0xff] %v30
    // Predicated region
    $region14: #{tpu_custom_call.1} parent=1 // pred_check
      _
    $region15: #{tpu_custom_call.1} parent=1 // pred_check_branch
      %34 = sbr.rel (0) target = $region17
    $region16: #{tpu_custom_call.1} parent=1 // pred_region
      %s36 = ssub.s32 256, 256
      %37 = vsyncadd [#allocation5], %s36
      %s39 = sshll.u32 [#allocation6], 4
      %s40 = int_to_ptr.vmem [resolvable:$true] %s39
      %42 = dma.vmem_to_hbm [thread:$0]  %s40, 256, %s2, [#allocation5]
    $region17: #{tpu_custom_call.1} parent=1 // pred_fallthru
      _
    // Predicated region
    $region18: #{tpu_custom_call.1} parent=1 // pred_check
      _
    $region19: #{tpu_custom_call.1} parent=1 // pred_check_branch
      %44 = sbr.rel (0) target = $region21
    $region20: #{tpu_custom_call.1} parent=1 // pred_region
      %45 = dma.done [#allocation5], 256
    $region21: #{tpu_custom_call.1} parent=1 // pred_fallthru
      _
    %46 = vsyncpa [#allocation4], 1
    %47 = vsyncpa [#allocation5], 1

</llo_original>
